<compile_context>
chip_gen: v6e
topology: v6e:2x2x1
jax: 0.10.0
libtpu: 0.0.40
codegen_flags: <defaults>
</compile_context>

<pallas_src>
import functools
import math

import jax
import jax.numpy as jnp
import numpy as np
from jax.experimental import pallas as pl
from jax.experimental.pallas import tpu as pltpu

_LANE = 128
_MAX_LANE_WIDTH = 16384            # cap on flattened lane width (elements)
_BLOCK_BYTES = 4 * 1024 * 1024     # ~4 MiB per block (dtype-aware row budget)
_MIN_GRID_STEPS = 4                # keep megacore / pipeline fed at tiny batch
_VMEM_LIMIT = 40 * 1024 * 1024     # > v5e 16 MiB default, < v7x 64 MiB physical


def _round_up(a: int, m: int) -> int:
    return -(-a // m) * m


def _sublane(itemsize: int) -> int:
    # Native sublane packing granularity: 8 (f32), 16 (bf16), 32 (int8/fp8).
    return max(8, 32 // itemsize)


def _choose_layout(F: int) -> tuple[int, int, int]:
    """Return (R, C, F_pad): C multiple of 128, R*C == F_pad >= F, minimal pad."""
    F_pad = _round_up(F, _LANE)
    c = min(F_pad, _MAX_LANE_WIDTH)
    c -= c % _LANE
    while c > _LANE and F_pad % c != 0:
        c -= _LANE
    return F_pad // c, c, F_pad


def _choose_row_tile(R: int, C: int, itemsize: int, B: int) -> int:
    """Largest legal row tile near the byte budget (cdiv grid handles raggedness)."""
    sub = _sublane(itemsize)
    budget = max(1, _BLOCK_BYTES // (C * itemsize))
    budget = max(sub, (budget // sub) * sub)          # sublane-aligned row budget
    if R > budget:
        return budget                                  # multiple of sublane -> legal
    tR = R                                             # block == full row dim -> legal
    if B < _MIN_GRID_STEPS and R >= 2 * sub:
        # Split rows (sublane-aligned) so megacore (2 TCs on v7x) and the DMA
        # pipeline still get a few grid steps to overlap at tiny batch sizes.
        want = max(2, _MIN_GRID_STEPS // max(B, 1))
        tR = min(R, _round_up(pl.cdiv(R, want), sub))
    return tR


def _add_pe_kernel(x_ref, pe_ref, o_ref):
    # Pure streaming VPU add: out = x + pe.  pe_ref (tR, C) broadcasts over the
    # leading batch dim of x_ref (1, tR, C).  No transcendentals in-kernel.
    o_ref[...] = (x_ref[...] + pe_ref[...]).astype(o_ref.dtype)


@functools.lru_cache(maxsize=None)
def _pe_table(S: int, D: int, dtype_name: str, C: int, F_pad: int) -> jax.Array:
    """Host-side (numpy) sin/cos table, built once per (S, D, dtype, layout)."""
    position = np.arange(S, dtype=np.float32)[:, None]                      # (S, 1)
    div_term = np.exp(
        np.arange(0, D, 2, dtype=np.float32) * (-math.log(10000.0) / D)
    )                                                                        # (ceil(D/2),)
    angles = position * div_term                                             # (S, ceil(D/2))
    pe = np.zeros((S, D), dtype=np.float32)
    pe[:, 0::2] = np.sin(angles)
    pe[:, 1::2] = np.cos(angles[:, : D // 2])
    flat = np.zeros((F_pad,), dtype=np.float32)
    flat[: S * D] = pe.reshape(-1)
    return jnp.asarray(flat.reshape(F_pad // C, C), dtype=jnp.dtype(dtype_name))


@functools.partial(jax.jit, static_argnames=("donate_x",))
def _pe_add(x: jax.Array, pe_flat: jax.Array, donate_x: bool = False) -> jax.Array:
    B, S, D = x.shape
    F = S * D
    R, C = pe_flat.shape
    F_pad = R * C
    itemsize = jnp.dtype(x.dtype).itemsize
    tR = _choose_row_tile(R, C, itemsize, B)
    nR = pl.cdiv(R, tR)

    x_flat = x.reshape(B, F)
    if F_pad != F:
        x_flat = jnp.pad(x_flat, ((0, 0), (0, F_pad - F)))
    x_flat = x_flat.reshape(B, R, C)

    out_flat = pl.pallas_call(
        _add_pe_kernel,
        out_shape=jax.ShapeDtypeStruct((B, R, C), x.dtype),
        grid_spec=pltpu.PrefetchScalarGridSpec(
            num_scalar_prefetch=0,
            # batch innermost: pe's block index repeats across consecutive
            # steps, so each pe tile is DMA'd once per row tile and stays
            # VMEM-resident across the whole batch.
            grid=(nR, B),
            in_specs=[
                pl.BlockSpec((1, tR, C), lambda r, b: (b, r, 0)),   # x
                pl.BlockSpec((tR, C), lambda r, b: (r, 0)),         # pe (batch-invariant)
            ],
            out_specs=pl.BlockSpec((1, tR, C), lambda r, b: (b, r, 0)),
        ),
        compiler_params=pltpu.CompilerParams(
            dimension_semantics=("parallel", "parallel"),
            vmem_limit_bytes=_VMEM_LIMIT,
        ),
        cost_estimate=pl.CostEstimate(
            flops=B * F_pad,
            transcendentals=0,
            bytes_accessed=(2 * B * F_pad + F_pad) * itemsize,
        ),
        # Alias x -> out when the caller can donate x (removes the extra output
        # allocation / copy-on-donate inside a larger graph).
        input_output_aliases=({0: 0} if donate_x else {}),
    )(x_flat, pe_flat)

    out = out_flat.reshape(B, F_pad)
    if F_pad != F:
        out = out[:, :F]
    return out.reshape(B, S, D)


def positional_encoding(x: jax.Array, max_len: int = 5000,
                        donate_x: bool = False) -> jax.Array:
    """x: [batch, seq_len, d_model] -> x + pe (dropout p=0.0 -> identity)."""
    B, S, D = x.shape
    assert S <= max_len, "seq_len exceeds max_len"
    F = S * D
    _, C, F_pad = _choose_layout(F)
    # Built once per (S, D, dtype, layout); cached as a device array.
    pe_flat = _pe_table(S, D, jnp.dtype(x.dtype).name, C, F_pad)
    # TODO(synk): dropout is p=0.0 in this config -> identity; nonzero p would
    # use pltpu.prng_seed + pltpu.stateful_bernoulli inside the kernel.
    return _pe_add(x, pe_flat, donate_x=donate_x)


def _reference(x: jax.Array) -> jax.Array:
    """Pure-JAX reference matching the PyTorch module (handles odd D too)."""
    B, S, D = x.shape
    position = jnp.arange(S, dtype=jnp.float32)[:, None]
    div_term = jnp.exp(
        jnp.arange(0, D, 2, dtype=jnp.float32) * (-math.log(10000.0) / D)
    )
    angles = position * div_term
    pe = jnp.zeros((S, D), dtype=jnp.float32)
    pe = pe.at[:, 0::2].set(jnp.sin(angles))
    pe = pe.at[:, 1::2].set(jnp.cos(angles[:, : D // 2]))
    return (x + pe[None, :, :]).astype(x.dtype)


if __name__ == "__main__":
    key = jax.random.PRNGKey(0)
    batch, seq_len, d_model = 2, 8, 32
    x = jax.random.normal(key, (batch, seq_len, d_model), dtype=jnp.float32)

    out = jax.block_until_ready(positional_encoding(x))
    ref = _reference(x)

    assert out.shape == x.shape and out.dtype == x.dtype
    assert jnp.allclose(out, ref, atol=1e-5, rtol=1e-5), "mismatch vs reference"

    print("KERNEL_OK")
</pallas_src>

<mosaic_0001>
module attributes {stable_mosaic.version = 11 : i64} {
  func.func @_add_pe_kernel(%arg0: i32, %arg1: i32, %arg2: memref<1x1x256xf32, #tpu.memory_space<vmem>>, %arg3: memref<1x256xf32, #tpu.memory_space<vmem>>, %arg4: memref<1x1x256xf32, #tpu.memory_space<vmem>>) attributes {dimension_semantics = [#tpu.dimension_semantics<parallel>, #tpu.dimension_semantics<parallel>], iteration_bounds = array<i64: 1, 2>, scalar_prefetch = 0 : i64, scratch_operands = 0 : i64, tpu.core_type = #tpu.core_type<tc>, window_params = [{transform_indices = @transform_0, window_bounds = array<i64: 1, 1, 256>}, {transform_indices = @transform_1, window_bounds = array<i64: 1, 256>}, {transform_indices = @transform_2, window_bounds = array<i64: 1, 1, 256>}]} {
    %c0 = arith.constant 0 : index
    %c0_0 = arith.constant 0 : index
    %c0_1 = arith.constant 0 : index
    %0 = vector.load %arg2[%c0, %c0_0, %c0_1] : memref<1x1x256xf32, #tpu.memory_space<vmem>>, vector<1x1x256xf32>
    %c0_2 = arith.constant 0 : index
    %c0_3 = arith.constant 0 : index
    %1 = vector.load %arg3[%c0_2, %c0_3] : memref<1x256xf32, #tpu.memory_space<vmem>>, vector<1x256xf32>
    %2 = vector.shape_cast %1 : vector<1x256xf32> to vector<1x1x256xf32>
    %3 = arith.addf %0, %2 : vector<1x1x256xf32>
    %c0_4 = arith.constant 0 : index
    %c0_5 = arith.constant 0 : index
    %c0_6 = arith.constant 0 : index
    %4 = vector.load %arg4[%c0_4, %c0_5, %c0_6] : memref<1x1x256xf32, #tpu.memory_space<vmem>>, vector<1x1x256xf32>
    tpu.vector_store %arg4[%c0_4, %c0_5, %c0_6], %3 {strides = array<i32>} : memref<1x1x256xf32, #tpu.memory_space<vmem>>, vector<1x1x256xf32>,
    return
  }
  func.func @transform_0(%arg0: i32, %arg1: i32) -> (i32, i32, i32) {
    %c0_i32 = arith.constant 0 : i32
    %c0_i32_0 = arith.constant 0 : i32
    return %arg1, %arg0, %c0_i32 : i32, i32, i32
  }
  func.func @transform_1(%arg0: i32, %arg1: i32) -> (i32, i32) {
    %c0_i32 = arith.constant 0 : i32
    %c0_i32_0 = arith.constant 0 : i32
    return %arg0, %c0_i32 : i32, i32
  }
  func.func @transform_2(%arg0: i32, %arg1: i32) -> (i32, i32, i32) {
    %c0_i32 = arith.constant 0 : i32
    %c0_i32_0 = arith.constant 0 : i32
    return %arg1, %arg0, %c0_i32 : i32, i32, i32
  }
}

</mosaic_0001>

<llo_original>
// kernel: _pe_add.1
$region0: #{_pe_add.1}
  #allocation0 [shape = 'u32[]', space=smem, size = 0x4, offset = 0x4, fixed_abs, tag = 'smem constant byte address 0x4 - core index']
  #allocation1 [shape = 'u32[144,128]{1,0:T(1,128)}', space=vmem, size = 0x12000, scoped, tag = 'internal scratch']
  %s0 = inlined_call_operand.vmem [shape: f32[2,1,256], index: 0, kind: input, shape index: {}]
  %s1 = inlined_call_operand.vmem [shape: f32[1,256], index: 1, kind: input, shape index: {}]
  %s2 = inlined_call_operand.vmem [shape: f32[2,1,256], index: 2, kind: output, shape index: {}]
  %s3 = sld [smem:[#allocation0]]
  $region41: #{_pe_add.1} parent=0
    _
  %s5 = ssub.s32 1, %s3
  %s6 = scalar_select 0, %s5, %s3
  loop: start=0, step=1, limit=4
  $region2: #{_pe_add.1} parent=0 // loop_pre_header
    _
  $region3: #{_pe_add.1} parent=0 // loop_header
    %s8 = sphi 0, %s12
    %p9 = scmp.ge.s32.totalorder %s8, 4
    %s15 = sphi 0, %s27
    %s16 = sphi 0, %s23
    %s17 = sphi 0, %s15
    %s18 = sphi 0, %s16
    %s19 = sphi 0, %s17
    %s20 = sphi 0, %s18
    %s32 = sphi 0, %s34
    %s35 = sphi 0, %s32
    %s36 = sphi 0, %s35
    %s52 = sphi 0, %s36
    %s58 = sphi 0, %s60
    %s61 = sphi 0, %s58
    %s62 = sphi 0, %s61
    %s78 = sphi 0, %s62
    %s86 = sphi 0, %s88
    %s89 = sphi 0, %s86
    %s90 = sphi 0, %s89
    %s106 = sphi 0, %s90
  $region4: #{_pe_add.1} parent=0 // loop_header_branch
    %11 = sbr.rel (%p9) target = $region8
  $region5: #{_pe_add.1} parent=0 // loop_body
    %s13 = ssub.s32 %s8, 1
    %s14 = ssub.s32 %s8, 2
    %s21 = sadd.s32 1, %s16
    %p22 = scmp.ge.s32.totalorder %s21, 2
    %s23 = scalar_select %p22, 0, %s21
    %s24 = sadd.s32 1, %s15
    %s25 = scalar_select %p22, %s24, %s15
    %p26 = scmp.ge.s32.totalorder %s25, 1
    %s27 = scalar_select %p26, 0, %s25
    %s28 = ssub.s32 %s16, %s23
    %s29 = ssub.s32 %s15, %s27
    %s30 = sor.u32 %s28, %s29
    %p31 = scmp.eq.s32.totalorder %s30, 0
    %s33 = sadd.s32 %s32, 1
    %s34 = scalar_select %p31, %s32, %s33
    %p37 = pneg %p31
    %p38 = scmp.eq.s32.totalorder %s8, 1
    %p39 = por %p37, %p38
    %p40 = scmp.ne.s32.totalorder %s32, %s35
    %p41 = scmp.eq.s32.totalorder %s8, 0
    %p42 = por %p40, %p41
    %p43 = scmp.ne.s32.totalorder %s32, %s35
    %p44 = scmp.eq.s32.totalorder %s13, 1
    %p45 = por %p43, %p44
    %p46 = scmp.ne.s32.totalorder %s35, %s36
    %p47 = scmp.eq.s32.totalorder %s13, 0
    %p48 = por %p46, %p47
    %p49 = scmp.ne.s32.totalorder %s35, %s36
    %p50 = scmp.eq.s32.totalorder %s14, 1
    %p51 = por %p49, %p50
    %p53 = scmp.ne.s32.totalorder %s36, %s52
    %p54 = scmp.eq.s32.totalorder %s14, 0
    %p55 = por %p53, %p54
    %s56 = ssub.s32 %s15, %s27
    %p57 = scmp.eq.s32.totalorder %s56, 0
    %s59 = sadd.s32 %s58, 1
    %s60 = scalar_select %p57, %s58, %s59
    %p63 = pneg %p57
    %p64 = scmp.eq.s32.totalorder %s8, 1
    %p65 = por %p63, %p64
    %p66 = scmp.ne.s32.totalorder %s58, %s61
    %p67 = scmp.eq.s32.totalorder %s8, 0
    %p68 = por %p66, %p67
    %p69 = scmp.ne.s32.totalorder %s58, %s61
    %p70 = scmp.eq.s32.totalorder %s13, 1
    %p71 = por %p69, %p70
    %p72 = scmp.ne.s32.totalorder %s61, %s62
    %p73 = scmp.eq.s32.totalorder %s13, 0
    %p74 = por %p72, %p73
    %p75 = scmp.ne.s32.totalorder %s61, %s62
    %p76 = scmp.eq.s32.totalorder %s14, 1
    %p77 = por %p75, %p76
    %p79 = scmp.ne.s32.totalorder %s62, %s78
    %p80 = scmp.eq.s32.totalorder %s14, 0
    %p81 = por %p79, %p80
    %s82 = ssub.s32 %s16, %s23
    %s83 = ssub.s32 %s15, %s27
    %s84 = sor.u32 %s82, %s83
    %p85 = scmp.eq.s32.totalorder %s84, 0
    %s87 = sadd.s32 %s86, 1
    %s88 = scalar_select %p85, %s86, %s87
    %p91 = pneg %p85
    %p92 = scmp.eq.s32.totalorder %s8, 1
    %p93 = por %p91, %p92
    %p94 = scmp.ne.s32.totalorder %s86, %s89
    %p95 = scmp.eq.s32.totalorder %s8, 0
    %p96 = por %p94, %p95
    %p97 = scmp.ne.s32.totalorder %s86, %s89
    %p98 = scmp.eq.s32.totalorder %s13, 1
    %p99 = por %p97, %p98
    %p100 = scmp.ne.s32.totalorder %s89, %s90
    %p101 = scmp.eq.s32.totalorder %s13, 0
    %p102 = por %p100, %p101
    %p103 = scmp.ne.s32.totalorder %s89, %s90
    %p104 = scmp.eq.s32.totalorder %s14, 1
    %p105 = por %p103, %p104
    %p107 = scmp.ne.s32.totalorder %s90, %s106
    %p108 = scmp.eq.s32.totalorder %s14, 0
    %p109 = por %p107, %p108
    %p110 = scmp.le.s32.totalorder 1, %s8
    %p111 = scmp.lt.s32.totalorder %s8, 3
    %p112 = pnand %p110, %p111
    %p113 = pneg %p112
    // Predicated region
    $region9: #{_pe_add.1} parent=5 // pred_check
      _
    $region10: #{_pe_add.1} parent=5 // pred_check_branch
      %115 = sbr.rel (%p112) target = $region12
    $region11: #{_pe_add.1} parent=5 // pred_region
      %s116 = ssub.s32 %s8, 1
      // Predicated region
      $region13: #{_pe_add.1} parent=11 // pred_check
        %p117 = pneg %p74
      $region14: #{_pe_add.1} parent=11 // pred_check_branch
        %119 = sbr.rel (%p117) target = $region16
      $region15: #{_pe_add.1} parent=11 // pred_region
        %p120 = scmp.lt.s32.totalorder %s17, 0
        %s121 = scalar_select %p120, %s17, 0
        %s122 = smul.addr %s121, 2
        %s123 = scalar_lea.vmem %s1, %s122
      $region16: #{_pe_add.1} parent=11 // pred_fallthru
        _
    $region12: #{_pe_add.1} parent=5 // pred_fallthru
      _
    %p124 = scmp.lt.s32.totalorder %s8, 2
    // Predicated region
    $region17: #{_pe_add.1} parent=5 // pred_check
      %p125 = pneg %p124
    $region18: #{_pe_add.1} parent=5 // pred_check_branch
      %127 = sbr.rel (%p125) target = $region20
    $region19: #{_pe_add.1} parent=5 // pred_region
      // Predicated region
      $region21: #{_pe_add.1} parent=19 // pred_check
        %p128 = pneg %p42
      $region22: #{_pe_add.1} parent=19 // pred_check_branch
        %130 = sbr.rel (%p128) target = $region24
      $region23: #{_pe_add.1} parent=19 // pred_region
        %p131 = scmp.lt.s32.totalorder %s16, 1
        %s132 = scalar_select %p131, %s16, 1
        %p133 = scmp.lt.s32.totalorder %s15, 0
        %s134 = scalar_select %p133, %s15, 0
        %s135 = smul.addr %s134, 2
        %s136 = smul.addr %s132, 2
        %s137 = sadd.s32 %s135, %s136
        %s138 = scalar_lea.vmem %s0, %s137
      $region24: #{_pe_add.1} parent=19 // pred_fallthru
        _
    $region20: #{_pe_add.1} parent=5 // pred_fallthru
      _
    %p139 = scmp.le.s32.totalorder 1, %s8
    %p140 = scmp.lt.s32.totalorder %s8, 3
    %p141 = pnand %p139, %p140
    %p142 = pneg %p141
    // Predicated region
    $region25: #{_pe_add.1} parent=5 // pred_check
      _
    $region26: #{_pe_add.1} parent=5 // pred_check_branch
      %144 = sbr.rel (%p141) target = $region28
    $region27: #{_pe_add.1} parent=5 // pred_region
      %s145 = ssub.s32 %s8, 1
      %p146 = scmp.lt.s32.totalorder %s18, 1
      %s147 = scalar_select %p146, %s18, 1
      %p148 = scmp.lt.s32.totalorder %s17, 0
      %s149 = scalar_select %p148, %s17, 0
      %s150 = smul.addr %s149, 2
      %s151 = smul.addr %s147, 2
      %s152 = sadd.s32 %s150, %s151
      %s153 = scalar_lea.vmem %s0, %s152
      %p154 = pneg %p48
      %p155 = pneg %p45
      %p156 = scmp.lt.s32.totalorder %s17, 0
      %s157 = scalar_select %p156, %s17, 0
      %s158 = smul.addr %s157, 2
      %s159 = scalar_lea.vmem %s1, %s158
      %p160 = pneg %p74
      %p161 = pneg %p71
      %p162 = pneg %p102
      %p163 = pneg %p99
      %p164 = scmp.lt.s32.totalorder %s18, 1
      %s165 = scalar_select %p164, %s18, 1
      %p166 = scmp.lt.s32.totalorder %s17, 0
      %s167 = scalar_select %p166, %s17, 0
      %s168 = smul.addr %s167, 2
      %s169 = smul.addr %s165, 2
      %s170 = sadd.s32 %s168, %s169
      %s171 = scalar_lea.vmem %s2, %s170
      %p172 = scmp.lt.s32.totalorder %s18, 1
      %s173 = scalar_select %p172, %s18, 1
      %p174 = scmp.lt.s32.totalorder %s17, 0
      %s175 = scalar_select %p174, %s17, 0
      %s176 = smul.addr %s175, 2
      %s177 = smul.addr %s173, 2
      %s178 = sadd.s32 %s176, %s177
      %s179 = scalar_lea.vmem %s0, %s178
      %p180 = scmp.lt.s32.totalorder %s17, 0
      %s181 = scalar_select %p180, %s17, 0
      %s182 = smul.addr %s181, 2
      %s183 = scalar_lea.vmem %s1, %s182
      %p184 = scmp.lt.s32.totalorder %s18, 1
      %s185 = scalar_select %p184, %s18, 1
      %p186 = scmp.lt.s32.totalorder %s17, 0
      %s187 = scalar_select %p186, %s17, 0
      %s188 = smul.addr %s187, 2
      %s189 = smul.addr %s185, 2
      %s190 = sadd.s32 %s188, %s189
      %s191 = scalar_lea.vmem %s2, %s190
      %v192 = vld [vmem:[%s179] sm:$0x3]
      %v193 = vld [vmem:[%s183] sm:$0x3]
      %v194 = vadd.f32 %v192, %v193
      %v195 = vlaneseq
      %vm196 = vcmp.ge.s32.totalorder %v195, 0
      %vm197 = vcmp.lt.s32.totalorder %v195, 256
      %vm198 = vmand %vm196, %vm197
      %199 = vst.msk [vmem:[%s191] sm:$0x3] %vm198, %v194
      %p200 = scmp.lt.s32.totalorder %s18, 1
      %s201 = scalar_select %p200, %s18, 1
      %p202 = scmp.lt.s32.totalorder %s17, 0
      %s203 = scalar_select %p202, %s17, 0
      %s204 = smul.addr %s203, 2
      %s205 = smul.addr %s201, 2
      %s206 = sadd.s32 %s204, %s205
      %s207 = scalar_lea.vmem %s2, %s206
      // Predicated region
      $region29: #{_pe_add.1} parent=27 // pred_check
        %p208 = pneg %p99
      $region30: #{_pe_add.1} parent=27 // pred_check_branch
        %210 = sbr.rel (%p208) target = $region32
      $region31: #{_pe_add.1} parent=27 // pred_region
        _
      $region32: #{_pe_add.1} parent=27 // pred_fallthru
        _
    $region28: #{_pe_add.1} parent=5 // pred_fallthru
      _
    %p211 = scmp.le.s32.totalorder 2, %s8
    // Predicated region
    $region33: #{_pe_add.1} parent=5 // pred_check
      %p212 = pneg %p211
    $region34: #{_pe_add.1} parent=5 // pred_check_branch
      %214 = sbr.rel (%p212) target = $region36
    $region35: #{_pe_add.1} parent=5 // pred_region
      %s215 = ssub.s32 %s8, 2
      // Predicated region
      $region37: #{_pe_add.1} parent=35 // pred_check
        %p216 = pneg %p105
      $region38: #{_pe_add.1} parent=35 // pred_check_branch
        %218 = sbr.rel (%p216) target = $region40
      $region39: #{_pe_add.1} parent=35 // pred_region
        %p219 = scmp.lt.s32.totalorder %s20, 1
        %s220 = scalar_select %p219, %s20, 1
        %p221 = scmp.lt.s32.totalorder %s19, 0
        %s222 = scalar_select %p221, %s19, 0
        %s223 = smul.addr %s222, 2
        %s224 = smul.addr %s220, 2
        %s225 = sadd.s32 %s223, %s224
        %s226 = scalar_lea.vmem %s2, %s225
      $region40: #{_pe_add.1} parent=35 // pred_fallthru
        _
    $region36: #{_pe_add.1} parent=5 // pred_fallthru
      _
  $region6: #{_pe_add.1} parent=0 // loop_footer
    %s12 = sadd.s32 1, %s8
  $region7: #{_pe_add.1} parent=0 // loop_footer_branch
    %7 = sbr.rel target = $region3
  $region8: #{_pe_add.1} parent=0 // loop_exit
    _

</llo_original>
